<compile_context>
chip_gen: v7x
topology: tpu7x:2x2x1
jax: 0.10.0
libtpu: 0.0.40
codegen_flags: <defaults>
</compile_context>

<pallas_src>
import jax
import jax.numpy as jnp
from jax.experimental import pallas as pl
from jax.experimental.pallas import tpu as pltpu


_LANE = 128
_SUBLANE = 8
_VMEM_TILE_BUDGET = 40 << 20     # tile planning budget (bytes), safe on v7x
_VMEM_LIMIT_CAP = 48 << 20       # never request more scoped VMEM than this
_SMALL_PROBLEM_MACS = 1 << 20    # below this a pallas_call is pure overhead


def _round_up(x, m):
    return ((x + m - 1) // m) * m


def _cdiv(a, b):
    return (a + b - 1) // b


def _vmem_footprint(tm, tn, tk, in_bytes, out_bytes, use_acc):
    """Approximate double-buffered VMEM use of one grid step."""
    x_tile = tm * tk * in_bytes
    w_tile = tk * tn * in_bytes
    b_tile = tn * 4
    o_tile = tm * tn * out_bytes
    acc = tm * tn * 4 if use_acc else 0
    return 2 * (x_tile + w_tile + b_tile + o_tile) + acc


# ---------------------------------------------------------------------------
# Kernels
# ---------------------------------------------------------------------------
def _linear_kernel_inplace(x_ref, w_ref, b_ref, o_ref):
    """f32 output: accumulate directly into the resident output block."""
    k = pl.program_id(2)

    @pl.when(k == 0)
    def _():
        o_ref[...] = jnp.zeros_like(o_ref)

    # Canonical (M,K) x (K,N) MXU matmul, f32 accumulation.
    o_ref[...] += jnp.dot(
        x_ref[...], w_ref[...], preferred_element_type=jnp.float32
    )

    @pl.when(k == pl.num_programs(2) - 1)
    def _():
        # Bias add rides in the VPU slot at the last k step.
        o_ref[...] += b_ref[...]


def _linear_kernel_acc(x_ref, w_ref, b_ref, o_ref, acc_ref):
    """Low-precision output: f32 VMEM accumulator, cast at writeback."""
    k = pl.program_id(2)

    @pl.when(k == 0)
    def _():
        acc_ref[...] = jnp.zeros_like(acc_ref)

    acc_ref[...] += jnp.dot(
        x_ref[...], w_ref[...], preferred_element_type=jnp.float32
    )

    @pl.when(k == pl.num_programs(2) - 1)
    def _():
        o_ref[...] = (acc_ref[...] + b_ref[...]).astype(o_ref.dtype)


# ---------------------------------------------------------------------------
# Parameter preparation (done ONCE per weight, not per call)
# ---------------------------------------------------------------------------
def prepare_linear_params(weight, bias, *, tm=512, tn=1024, tk=1024,
                          compute_dtype=None):
    """Pre-transpose / pad nn.Linear parameters (weight-stationary layout).

    weight: (D_out, D_in)  PyTorch layout
    bias:   (D_out,)
    Returns a dict consumed by linear_forward().
    """
    D_out, D_in = weight.shape
    if compute_dtype is None:
        compute_dtype = jnp.asarray(weight).dtype
    compute_dtype = jnp.dtype(compute_dtype)

    # Clamp tiles to the (lane/sublane aligned) problem size.
    tk = min(tk, _round_up(D_in, _LANE))
    tn = min(tn, _round_up(D_out, _LANE))
    tm = max(_SUBLANE, _round_up(tm, _SUBLANE))

    in_bytes = compute_dtype.itemsize

    # Shrink tiles until the double-buffered footprint fits the VMEM budget
    # (conservative: assumes f32 output + accumulator).
    while _vmem_footprint(tm, tn, tk, in_bytes, 4, True) > _VMEM_TILE_BUDGET:
        if tk >= tn and tk > _LANE:
            tk = max(_LANE, tk // 2)
        elif tn > _LANE:
            tn = max(_LANE, tn // 2)
        elif tm > _SUBLANE:
            tm = max(_SUBLANE, _round_up(tm // 2, _SUBLANE))
        else:
            break

    Kp = _round_up(D_in, tk)
    Np = _round_up(D_out, tn)

    # One-time transform: transpose to (K, N) so the kernel contracts in
    # canonical MXU form; pad K/N to tile multiples (K zero-pad is exact).
    w_t = jnp.asarray(weight).T.astype(compute_dtype)          # (D_in, D_out)
    if (Kp - D_in) or (Np - D_out):
        w_t = jnp.pad(w_t, ((0, Kp - D_in), (0, Np - D_out)))
    b2d = jnp.asarray(bias, dtype=jnp.float32).reshape(1, D_out)
    if Np - D_out:
        b2d = jnp.pad(b2d, ((0, 0), (0, Np - D_out)))

    return dict(w_p=w_t, b_p=b2d, D_in=D_in, D_out=D_out,
                Kp=Kp, Np=Np, tm=tm, tn=tn, tk=tk,
                compute_dtype=compute_dtype)


# ---------------------------------------------------------------------------
# Forward
# ---------------------------------------------------------------------------
def linear_forward(x, params, *, force_pallas=False):
    """y = x @ weight.T + bias  (semantics of torch.nn.Linear)."""
    B, D_in = x.shape
    assert D_in == params["D_in"], "input_dim mismatch with prepared params"
    D_out = params["D_out"]
    Kp, Np = params["Kp"], params["Np"]
    tn, tk = params["tn"], params["tk"]
    cdt = params["compute_dtype"]
    out_dtype = x.dtype

    # Small-problem fast path: XLA fuses the tiny GEMM for free; a
    # pallas_call (+ pad copies) would be overhead-bound here.
    if (not force_pallas) and (B * D_in * D_out) < _SMALL_PROBLEM_MACS:
        w_valid = params["w_p"][:D_in, :D_out].astype(out_dtype)
        b_valid = params["b_p"][0, :D_out].astype(out_dtype)
        return (x @ w_valid + b_valid).astype(out_dtype)

    tm = min(params["tm"], _round_up(B, _SUBLANE))
    grid_n = Np // tn

    # v7x megacore: ensure >=2 parallel blocks when the batch allows it,
    # otherwise one TensorCore idles.
    while _cdiv(B, tm) * grid_n < 2 and tm >= 16 and B > tm // 2:
        tm = max(_SUBLANE, _round_up(tm // 2, _SUBLANE))

    Mp = _round_up(B, tm)
    grid_m, grid_k = Mp // tm, Kp // tk
    grid = (grid_m, grid_n, grid_k)

    # Pad the activation only when needed (K zero-pad is exact; padded M rows
    # are sliced away below).
    x_p = x.astype(cdt)
    if (Mp - B) or (Kp - D_in):
        x_p = jnp.pad(x_p, ((0, Mp - B), (0, Kp - D_in)))

    in_bytes = cdt.itemsize
    out_bytes = jnp.dtype(out_dtype).itemsize
    use_acc = out_dtype != jnp.float32

    vmem_needed = _vmem_footprint(tm, tn, tk, in_bytes, out_bytes, use_acc)
    vmem_limit = int(min(_VMEM_LIMIT_CAP, max(vmem_needed + (4 << 20), 32 << 20)))

    cost = pl.CostEstimate(
        flops=2 * Mp * Kp * Np,
        transcendentals=0,
        # Tiled re-streaming: x re-read per N tile, w re-read per M tile.
        bytes_accessed=(in_bytes * Mp * Kp * grid_n
                        + in_bytes * Kp * Np * grid_m
                        + out_bytes * Mp * Np
                        + 4 * Np * grid_m),
    )

    kernel = _linear_kernel_acc if use_acc else _linear_kernel_inplace
    scratch = [pltpu.VMEM((tm, tn), jnp.float32)] if use_acc else []

    out_p = pl.pallas_call(
        kernel,
        out_shape=jax.ShapeDtypeStruct((Mp, Np), out_dtype),
        grid_spec=pltpu.PrefetchScalarGridSpec(
            num_scalar_prefetch=0,
            grid=grid,
            in_specs=[
                pl.BlockSpec((tm, tk), lambda i, j, k: (i, k)),   # x tile
                pl.BlockSpec((tk, tn), lambda i, j, k: (k, j)),   # w tile
                pl.BlockSpec((1, tn), lambda i, j, k: (0, j)),    # bias row
            ],
            out_specs=pl.BlockSpec((tm, tn), lambda i, j, k: (i, j)),
            scratch_shapes=scratch,
        ),
        compiler_params=pltpu.CompilerParams(
            dimension_semantics=("parallel", "parallel", "arbitrary"),
            vmem_limit_bytes=vmem_limit,
        ),
        cost_estimate=cost,
    )(x_p, params["w_p"], params["b_p"])

    return out_p[:B, :D_out]


def linear(x, weight, bias, **kwargs):
    """One-shot convenience wrapper (prepares params inline)."""
    return linear_forward(x, prepare_linear_params(weight, bias), **kwargs)


if __name__ == "__main__":
    key = jax.random.PRNGKey(0)
    kx, kw, kb, kx2, kw2, kb2 = jax.random.split(key, 6)

    # --- toy size matching the module: batch=8, input_dim=16, output_dim=4 ---
    batch, input_dim, output_dim = 8, 16, 4
    bound = 1.0 / (input_dim ** 0.5)
    x = jax.random.normal(kx, (batch, input_dim), dtype=jnp.float32)
    weight = jax.random.uniform(kw, (output_dim, input_dim),
                                minval=-bound, maxval=bound, dtype=jnp.float32)
    bias = jax.random.uniform(kb, (output_dim,),
                              minval=-bound, maxval=bound, dtype=jnp.float32)

    params = prepare_linear_params(weight, bias)
    ref = x @ weight.T + bias

    # Pallas path (forced: at this size the fast path would normally be used).
    out_pallas = linear_forward(x, params, force_pallas=True)
    jax.block_until_ready(out_pallas)
    assert out_pallas.shape == (batch, output_dim)
    assert jnp.allclose(out_pallas, ref, atol=1e-5, rtol=1e-5)

    # Fast path (what a real model would take at toy size).
    out_fast = linear_forward(x, params)
    jax.block_until_ready(out_fast)
    assert jnp.allclose(out_fast, ref, atol=1e-5, rtol=1e-5)

    # --- modest unaligned case exercising M/N/K tiling + k accumulation -----
    B2, K2, N2 = 200, 300, 180
    x2 = jax.random.normal(kx2, (B2, K2), dtype=jnp.float32)
    w2 = jax.random.normal(kw2, (N2, K2), dtype=jnp.float32) * 0.05
    b2 = jax.random.normal(kb2, (N2,), dtype=jnp.float32)
    params2 = prepare_linear_params(w2, b2, tm=64, tn=128, tk=128)
    out2 = linear_forward(x2, params2, force_pallas=True)
    jax.block_until_ready(out2)
    ref2 = jnp.matmul(x2, w2.T, precision=jax.lax.Precision.HIGHEST) + b2
    assert out2.shape == (B2, N2)
    assert jnp.allclose(out2, ref2, atol=5e-3, rtol=5e-3)

    print("KERNEL_OK")
</pallas_src>

<mosaic_0001>
module attributes {stable_mosaic.version = 11 : i64} {
  func.func @_linear_kernel_inplace(%arg0: i32, %arg1: i32, %arg2: i32, %arg3: memref<8x128xf32, #tpu.memory_space<vmem>>, %arg4: memref<128x128xf32, #tpu.memory_space<vmem>>, %arg5: memref<1x128xf32, #tpu.memory_space<vmem>>, %arg6: memref<8x128xf32, #tpu.memory_space<vmem>>) attributes {dimension_semantics = [#tpu.dimension_semantics<parallel>, #tpu.dimension_semantics<parallel>, #tpu.dimension_semantics<arbitrary>], iteration_bounds = array<i64: 1, 1, 1>, scalar_prefetch = 0 : i64, scratch_operands = 0 : i64, tpu.core_type = #tpu.core_type<tc>, window_params = [{transform_indices = @transform_0, window_bounds = array<i64: 8, 128>}, {transform_indices = @transform_1, window_bounds = array<i64: 128, 128>}, {transform_indices = @transform_2, window_bounds = array<i64: 1, 128>}, {transform_indices = @transform_3, window_bounds = array<i64: 8, 128>}]} {
    %c0_i32 = arith.constant 0 : i32
    %0 = arith.cmpi eq, %arg2, %c0_i32 : i32
    %1 = arith.extui %0 : i1 to i32
    %c0_i32_0 = arith.constant 0 : i32
    %2 = arith.cmpi ne, %1, %c0_i32_0 : i32
    scf.if %2 {
      %cst_10 = arith.constant 0.000000e+00 : f32
      %12 = vector.broadcast %cst_10 : f32 to vector<8x128xf32>
      %c0_11 = arith.constant 0 : index
      %c0_12 = arith.constant 0 : index
      %13 = vector.load %arg6[%c0_11, %c0_12] : memref<8x128xf32, #tpu.memory_space<vmem>>, vector<8x128xf32>
      tpu.vector_store %arg6[%c0_11, %c0_12], %12 {strides = array<i32>} : memref<8x128xf32, #tpu.memory_space<vmem>>, vector<8x128xf32>,
    } else {
    }
    %c0 = arith.constant 0 : index
    %c0_1 = arith.constant 0 : index
    %3 = vector.load %arg6[%c0, %c0_1] : memref<8x128xf32, #tpu.memory_space<vmem>>, vector<8x128xf32>
    %c0_2 = arith.constant 0 : index
    %c0_3 = arith.constant 0 : index
    %4 = vector.load %arg3[%c0_2, %c0_3] : memref<8x128xf32, #tpu.memory_space<vmem>>, vector<8x128xf32>
    %c0_4 = arith.constant 0 : index
    %c0_5 = arith.constant 0 : index
    %5 = vector.load %arg4[%c0_4, %c0_5] : memref<128x128xf32, #tpu.memory_space<vmem>>, vector<128x128xf32>
    %cst = arith.constant dense<0.000000e+00> : vector<8x128xf32>
    %6 = tpu.matmul %4, %5, %cst {dimension_numbers = #tpu.dot_dimension_numbers<[1], [0], [0], [1], [0, 0, 1, 1], [], []>} : vector<8x128xf32>, vector<128x128xf32>, vector<8x128xf32> -> vector<8x128xf32>
    %7 = arith.addf %3, %6 : vector<8x128xf32>
    %c0_6 = arith.constant 0 : index
    %c0_7 = arith.constant 0 : index
    %8 = vector.load %arg6[%c0_6, %c0_7] : memref<8x128xf32, #tpu.memory_space<vmem>>, vector<8x128xf32>
    tpu.vector_store %arg6[%c0_6, %c0_7], %7 {strides = array<i32>} : memref<8x128xf32, #tpu.memory_space<vmem>>, vector<8x128xf32>,
    %c0_i32_8 = arith.constant 0 : i32
    %9 = arith.cmpi eq, %arg2, %c0_i32_8 : i32
    %10 = arith.extui %9 : i1 to i32
    %c0_i32_9 = arith.constant 0 : i32
    %11 = arith.cmpi ne, %10, %c0_i32_9 : i32
    scf.if %11 {
      %c0_10 = arith.constant 0 : index
      %c0_11 = arith.constant 0 : index
      %12 = vector.load %arg6[%c0_10, %c0_11] : memref<8x128xf32, #tpu.memory_space<vmem>>, vector<8x128xf32>
      %c0_12 = arith.constant 0 : index
      %c0_13 = arith.constant 0 : index
      %13 = vector.load %arg5[%c0_12, %c0_13] : memref<1x128xf32, #tpu.memory_space<vmem>>, vector<1x128xf32>
      %14 = vector.broadcast %13 : vector<1x128xf32> to vector<8x128xf32>
      %15 = arith.addf %12, %14 : vector<8x128xf32>
      %c0_14 = arith.constant 0 : index
      %c0_15 = arith.constant 0 : index
      %16 = vector.load %arg6[%c0_14, %c0_15] : memref<8x128xf32, #tpu.memory_space<vmem>>, vector<8x128xf32>
      tpu.vector_store %arg6[%c0_14, %c0_15], %15 {strides = array<i32>} : memref<8x128xf32, #tpu.memory_space<vmem>>, vector<8x128xf32>,
    } else {
    }
    return
  }
  func.func @transform_0(%arg0: i32, %arg1: i32, %arg2: i32) -> (i32, i32) {
    %c0_i32 = arith.constant 0 : i32
    return %arg0, %arg2 : i32, i32
  }
  func.func @transform_1(%arg0: i32, %arg1: i32, %arg2: i32) -> (i32, i32) {
    %c0_i32 = arith.constant 0 : i32
    return %arg2, %arg1 : i32, i32
  }
  func.func @transform_2(%arg0: i32, %arg1: i32, %arg2: i32) -> (i32, i32) {
    %c0_i32 = arith.constant 0 : i32
    %c0_i32_0 = arith.constant 0 : i32
    return %c0_i32, %arg1 : i32, i32
  }
  func.func @transform_3(%arg0: i32, %arg1: i32, %arg2: i32) -> (i32, i32) {
    %c0_i32 = arith.constant 0 : i32
    return %arg0, %arg1 : i32, i32
  }
}

</mosaic_0001>

<llo_original>
// kernel: tpu_custom_call.1
$region0: #{tpu_custom_call.1}
  #allocation0 [shape = 'u32[]', space=smem, size = 0x4, offset = 0x4, fixed_abs, tag = 'smem constant byte address 0x4 - core index']
  #allocation1 [shape = 'u32[144,128]{1,0:T(1,128)}', space=vmem, size = 0x12000, scoped, tag = 'internal scratch']
  %s0 = inlined_call_operand.hbm [shape: f32[8,128], index: 0, kind: input, shape index: {}]
  %s1 = inlined_call_operand.hbm [shape: f32[128,128], index: 1, kind: input, shape index: {}]
  %s2 = inlined_call_operand.vmem [shape: f32[1,128], index: 2, kind: input, shape index: {}]
  %s3 = inlined_call_operand.hbm [shape: f32[8,128], index: 3, kind: output, shape index: {}]
  %s4 = sld [smem:[#allocation0]]
  $region38: #{tpu_custom_call.1} parent=0
    _
  %s6 = ssub.s32 1, %s4
  %s7 = scalar_select 0, %s6, %s4
  $region1: #{tpu_custom_call.1} parent=0
    #allocation2 [shape = 'u8[4096]{0}', space=vmem, size = 0x1000, scoped, tag = 'input window, operand 0, single buffered']
    #allocation3 [shape = 's32[1]{0}', space=sflag, size = 0x4, scoped, tag = 'scoped memory for tpu_custom_call.1']
    #allocation4 [shape = 's32[1]{0}', space=sflag, size = 0x4, scoped, tag = 'scoped memory for tpu_custom_call.1']
    #allocation5 [shape = 'u8[65536]{0}', space=vmem, size = 0x10000, scoped, tag = 'input window, operand 1, single buffered']
    #allocation6 [shape = 's32[1]{0}', space=sflag, size = 0x4, scoped, tag = 'scoped memory for tpu_custom_call.1']
    #allocation7 [shape = 'u8[4096]{0}', space=vmem, size = 0x1000, scoped, tag = 'output window, operand 0, single buffered']
    %8 = vsyncpa [#allocation3], 0
    %9 = vsyncpa [#allocation6], 0
    %10 = vsyncpa [#allocation4], 0
    // Predicated region
    $region2: #{tpu_custom_call.1} parent=1 // pred_check
      _
    $region3: #{tpu_custom_call.1} parent=1 // pred_check_branch
      %12 = sbr.rel (0) target = $region5
    $region4: #{tpu_custom_call.1} parent=1 // pred_region
      %s14 = ssub.s32 128, 128
      %15 = vsyncadd [#allocation3], %s14
      %s17 = sshll.u32 [#allocation2], 4
      %s18 = int_to_ptr.vmem [resolvable:$true] %s17
      %20 = dma.hbm_to_vmem [thread:$0]  %s0, 128, %s18, [#allocation3]
    $region5: #{tpu_custom_call.1} parent=1 // pred_fallthru
      _
    // Predicated region
    $region6: #{tpu_custom_call.1} parent=1 // pred_check
      _
    $region7: #{tpu_custom_call.1} parent=1 // pred_check_branch
      %22 = sbr.rel (0) target = $region9
    $region8: #{tpu_custom_call.1} parent=1 // pred_region
      %s24 = ssub.s32 2048, 2048
      %25 = vsyncadd [#allocation6], %s24
      %s26 = sshll.u32 [#allocation5], 4
      %s27 = int_to_ptr.vmem [resolvable:$true] %s26
      %32 = dma.hbm_to_vmem [thread:$0]  %s1, 2048, %s27, [#allocation6], 128, 128, 8
    $region9: #{tpu_custom_call.1} parent=1 // pred_fallthru
      _
    // Predicated region
    $region10: #{tpu_custom_call.1} parent=1 // pred_check
      _
    $region11: #{tpu_custom_call.1} parent=1 // pred_check_branch
      %34 = sbr.rel (0) target = $region13
    $region12: #{tpu_custom_call.1} parent=1 // pred_region
      _
    $region13: #{tpu_custom_call.1} parent=1 // pred_fallthru
      _
    // Predicated region
    $region14: #{tpu_custom_call.1} parent=1 // pred_check
      _
    $region15: #{tpu_custom_call.1} parent=1 // pred_check_branch
      %36 = sbr.rel (0) target = $region17
    $region16: #{tpu_custom_call.1} parent=1 // pred_region
      %37 = dma.done [#allocation3], 128
    $region17: #{tpu_custom_call.1} parent=1 // pred_fallthru
      _
    // Predicated region
    $region18: #{tpu_custom_call.1} parent=1 // pred_check
      _
    $region19: #{tpu_custom_call.1} parent=1 // pred_check_branch
      %39 = sbr.rel (0) target = $region21
    $region20: #{tpu_custom_call.1} parent=1 // pred_region
      %40 = dma.done [#allocation6], 2048
    $region21: #{tpu_custom_call.1} parent=1 // pred_fallthru
      _
    %p41 = scmp.eq.s32.totalorder 0, 0
    // Predicated region
    $region22: #{tpu_custom_call.1} parent=1 // pred_check
      %p42 = pneg %p41
    $region23: #{tpu_custom_call.1} parent=1 // pred_check_branch
      %44 = sbr.rel (%p42) target = $region25
    $region24: #{tpu_custom_call.1} parent=1 // pred_region
      %45 = vst [vmem:[#allocation7] sm:$0xff] 0.0
    $region25: #{tpu_custom_call.1} parent=1 // pred_fallthru
      _
    %v46 = vld [vmem:[#allocation7] sm:$0xff]
    %v47 = vld [vmem:[#allocation2] sm:$0xff]
    %v48 = vld [vmem:[#allocation5] sm:$0xff]
    %v49 = vld [vmem:[#allocation5 + $0x8] sm:$0xff]
    %v50 = vld [vmem:[#allocation5 + $0x10] sm:$0xff]
    %v51 = vld [vmem:[#allocation5 + $0x18] sm:$0xff]
    %v52 = vld [vmem:[#allocation5 + $0x20] sm:$0xff]
    %v53 = vld [vmem:[#allocation5 + $0x28] sm:$0xff]
    %v54 = vld [vmem:[#allocation5 + $0x30] sm:$0xff]
    %v55 = vld [vmem:[#allocation5 + $0x38] sm:$0xff]
    %v56 = vld [vmem:[#allocation5 + $0x40] sm:$0xff]
    %v57 = vld [vmem:[#allocation5 + $0x48] sm:$0xff]
    %v58 = vld [vmem:[#allocation5 + $0x50] sm:$0xff]
    %v59 = vld [vmem:[#allocation5 + $0x58] sm:$0xff]
    %v60 = vld [vmem:[#allocation5 + $0x60] sm:$0xff]
    %v61 = vld [vmem:[#allocation5 + $0x68] sm:$0xff]
    %v62 = vld [vmem:[#allocation5 + $0x70] sm:$0xff]
    %v63 = vld [vmem:[#allocation5 + $0x78] sm:$0xff]
    %64 = vmatprep.subr.mxu0 0.0
    %65 = vmatpush1.msra.mxu0 %v48
    %66 = vmatprep.subr.mxu0 0.0
    %67 = vmatpush1.msra.mxu0 %v49
    %68 = vmatprep.subr.mxu0 0.0
    %69 = vmatpush1.msra.mxu0 %v50
    %70 = vmatprep.subr.mxu0 0.0
    %71 = vmatpush1.msra.mxu0 %v51
    %72 = vmatprep.subr.mxu0 0.0
    %73 = vmatpush1.msra.mxu0 %v52
    %74 = vmatprep.subr.mxu0 0.0
    %75 = vmatpush1.msra.mxu0 %v53
    %76 = vmatprep.subr.mxu0 0.0
    %77 = vmatpush1.msra.mxu0 %v54
    %78 = vmatprep.subr.mxu0 0.0
    %79 = vmatpush1.msra.mxu0 %v55
    %80 = vmatprep.subr.mxu0 0.0
    %81 = vmatpush1.msra.mxu0 %v56
    %82 = vmatprep.subr.mxu0 0.0
    %83 = vmatpush1.msra.mxu0 %v57
    %84 = vmatprep.subr.mxu0 0.0
    %85 = vmatpush1.msra.mxu0 %v58
    %86 = vmatprep.subr.mxu0 0.0
    %87 = vmatpush1.msra.mxu0 %v59
    %88 = vmatprep.subr.mxu0 0.0
    %89 = vmatpush1.msra.mxu0 %v60
    %90 = vmatprep.subr.mxu0 0.0
    %91 = vmatpush1.msra.mxu0 %v61
    %92 = vmatprep.subr.mxu0 0.0
    %93 = vmatpush1.msra.mxu0 %v62
    %94 = vmatprep.subr.mxu0 0.0
    %95 = vmatpush1.msra.mxu0 %v63
    %96 = vmatprep.subr.mxu0 0.0
    %97 = vmatpush1.msra.mxu0 0.0
    %98 = vmatprep.subr.mxu0 0.0
    %99 = vmatpush1.msra.mxu0 0.0
    %100 = vmatprep.subr.mxu0 0.0
    %101 = vmatpush1.msra.mxu0 0.0
    %102 = vmatprep.subr.mxu0 0.0
    %103 = vmatpush1.msra.mxu0 0.0
    %104 = vmatprep.subr.mxu0 0.0
    %105 = vmatpush1.msra.mxu0 0.0
    %106 = vmatprep.subr.mxu0 0.0
    %107 = vmatpush1.msra.mxu0 0.0
    %108 = vmatprep.subr.mxu0 0.0
    %109 = vmatpush1.msra.mxu0 0.0
    %110 = vmatprep.subr.mxu0 0.0
    %111 = vmatpush1.msra.mxu0 0.0
    %112 = vmatprep.subr.mxu0 0.0
    %113 = vmatpush1.msra.mxu0 0.0
    %114 = vmatprep.subr.mxu0 0.0
    %115 = vmatpush1.msra.mxu0 0.0
    %116 = vmatprep.subr.mxu0 0.0
    %117 = vmatpush1.msra.mxu0 0.0
    %118 = vmatprep.subr.mxu0 0.0
    %119 = vmatpush1.msra.mxu0 0.0
    %120 = vmatprep.subr.mxu0 0.0
    %121 = vmatpush1.msra.mxu0 0.0
    %122 = vmatprep.subr.mxu0 0.0
    %123 = vmatpush1.msra.mxu0 0.0
    %124 = vmatprep.subr.mxu0 0.0
    %125 = vmatpush1.msra.mxu0 0.0
    %126 = vmatprep.subr.mxu0 0.0
    %127 = vmatpush1.msra.mxu0 0.0
    %128 = vmatprep.mubr.f32.mxu0 0.0
    %129 = vmatmul.mubr.f32.gmra.mrb[0].mxu0 %v47
    %v130 = vpop.f32.mrb[0].mxu0
    %v131 = vadd.f32 0.0, %v130
    %v132 = vpop.f32.mrb[0].mxu0
    %133 = vdwg.mxu0
    %v134 = vadd.f32 %v46, %v131
    %135 = vst [vmem:[#allocation7] sm:$0xff] %v134
    // Predicated region
    $region26: #{tpu_custom_call.1} parent=1 // pred_check
      %p136 = pneg %p41
    $region27: #{tpu_custom_call.1} parent=1 // pred_check_branch
      %138 = sbr.rel (%p136) target = $region29
    $region28: #{tpu_custom_call.1} parent=1 // pred_region
      %v139 = vld [vmem:[#allocation7] sm:$0xff]
      %v140 = vld [vmem:[%s2] sm:$0x1]
      %v142 = vlaneseq
      %v143 = vshrl.u32 %v142, 7
      %v144 = vsub.s32 0, %v143
      %v145 = vrot.slane %v140, %v144
      %v147 = vadd.f32 %v139, %v145
      %148 = vst [vmem:[#allocation7] sm:$0xff] %v147
    $region29: #{tpu_custom_call.1} parent=1 // pred_fallthru
      _
    // Predicated region
    $region30: #{tpu_custom_call.1} parent=1 // pred_check
      _
    $region31: #{tpu_custom_call.1} parent=1 // pred_check_branch
      %150 = sbr.rel (0) target = $region33
    $region32: #{tpu_custom_call.1} parent=1 // pred_region
      %s152 = ssub.s32 128, 128
      %153 = vsyncadd [#allocation4], %s152
      %s155 = sshll.u32 [#allocation7], 4
      %s156 = int_to_ptr.vmem [resolvable:$true] %s155
      %158 = dma.vmem_to_hbm [thread:$0]  %s156, 128, %s3, [#allocation4]
    $region33: #{tpu_custom_call.1} parent=1 // pred_fallthru
      _
    // Predicated region
    $region34: #{tpu_custom_call.1} parent=1 // pred_check
      _
    $region35: #{tpu_custom_call.1} parent=1 // pred_check_branch
      %160 = sbr.rel (0) target = $region37
    $region36: #{tpu_custom_call.1} parent=1 // pred_region
      %161 = dma.done [#allocation4], 128
    $region37: #{tpu_custom_call.1} parent=1 // pred_fallthru
      _
    %162 = vsyncpa [#allocation3], 1
    %163 = vsyncpa [#allocation6], 1
    %164 = vsyncpa [#allocation4], 1

</llo_original>
